<compile_context>
chip_gen: v5e
topology: v5e:2x2
jax: 0.10.0
libtpu: 0.0.40
codegen_flags: <defaults>
</compile_context>

<pallas_src>
import functools

import jax
import jax.numpy as jnp
from jax.experimental import pallas as pl
from jax.experimental.pallas import tpu as pltpu


def _round_up(x, m):
    return (x + m - 1) // m * m


def _cdiv(a, b):
    return (a + b - 1) // b


@functools.lru_cache(maxsize=None)
def _vmem_budget_bytes():
    """~80% of physical per-core VMEM (headroom for compiler scratch/semaphores)."""
    try:
        info = pltpu.get_tpu_info()
        cap = int(getattr(info, "vmem_capacity_bytes", 64 * 1024 * 1024))
    except Exception:
        cap = 64 * 1024 * 1024  # conservative fallback, safe on every generation
    return int(cap * 0.8)


def _message_kernel(msg_ref, skip_ref, w_ref, b_ref, out_ref, *, activation):
    # msg_ref:  (tm, K)  row tile of flattened message (f32 or bf16)
    # skip_ref: (tm, tn) matching tile of the residual (added in f32)
    # w_ref:    (K, tn)  pre-transposed weight (fully resident in the 1-D path)
    # b_ref:    (1, tn)  bias row (f32)
    # out_ref:  (tm, tn)
    a = jnp.dot(msg_ref[...], w_ref[...], preferred_element_type=jnp.float32)
    a = a + b_ref[...] + skip_ref[...].astype(jnp.float32)
    if activation == "relu":
        a = jnp.maximum(a, 0.0)
    elif activation == "sigmoid":
        a = jax.nn.sigmoid(a)
    elif activation == "tanh":
        a = jnp.tanh(a)
    # "linear": pass-through
    out_ref[...] = a.astype(out_ref.dtype)


@functools.partial(jax.jit, static_argnames=("row_tile", "out_dtype", "activation"))
def message_forward(message, skip, weight_t, bias, *,
                    row_tile=512, out_dtype=None, activation="relu"):
    """act(message @ W.T + b + skip).  message/skip: (B, N, H); weight_t = W.T: (H, H).

    Big streams are used in the dtype they arrive in (pass bf16 message/weight
    for the bandwidth-bound fast path); accumulation / bias / skip add are f32.
    """
    B, N, H = message.shape
    if out_dtype is None:
        out_dtype = message.dtype
    M = B * N

    msg2d = message.reshape(M, H)
    skip2d = skip.reshape(M, H)
    bias2d = bias.reshape(1, H).astype(jnp.float32)

    msg_b = jnp.dtype(msg2d.dtype).itemsize
    skip_b = jnp.dtype(skip2d.dtype).itemsize
    w_b = jnp.dtype(weight_t.dtype).itemsize
    out_b = jnp.dtype(out_dtype).itemsize

    vmem_cap = _vmem_budget_bytes()

    # --- layout choice -------------------------------------------------------
    # 1-D row grid with fully resident weight whenever the weight is small
    # enough (always true for realistic n_hidden); 2-D fallback otherwise.
    one_d = H * H * w_b <= 16 * 1024 * 1024
    if one_d:
        Hp, K, tn, n_col = H, H, H, 1
    else:
        Hp = _round_up(H, 256)
        tn = 512 if Hp % 512 == 0 else 256
        K, n_col = Hp, Hp // tn

    def _need(tm_):  # double-buffered working set for one grid step
        return (2 * tm_ * K * msg_b + 2 * tm_ * tn * skip_b
                + 2 * K * tn * w_b + 2 * tm_ * tn * out_b + 2 * tn * 4)

    row_target = max(8, row_tile)
    while row_target > 64 and _need(row_target) > int(vmem_cap * 0.85):
        row_target //= 2

    # Divisor-aware row tile: padding waste bounded to < 8 rows per row block.
    Mp8 = _round_up(M, 8)
    n_row = max(1, _cdiv(Mp8, row_target))
    tm = _round_up(_cdiv(Mp8, n_row), 8)
    Mp = tm * n_row

    if Mp != M or Hp != H:
        msg2d = jnp.pad(msg2d, ((0, Mp - M), (0, Hp - H)))
        skip2d = jnp.pad(skip2d, ((0, Mp - M), (0, Hp - H)))
    if Hp != H:
        weight_t = jnp.pad(weight_t, ((0, Hp - H), (0, Hp - H)))
        bias2d = jnp.pad(bias2d, ((0, 0), (0, Hp - H)))

    vmem_limit = int(min(vmem_cap, max(_need(tm) * 1.5, 16 * 1024 * 1024)))

    if one_d:
        grid = (n_row,)
        in_specs = [
            pl.BlockSpec((tm, H), lambda i: (i, 0)),   # message rows (streamed once)
            pl.BlockSpec((tm, H), lambda i: (i, 0)),   # skip rows
            pl.BlockSpec((H, H), lambda i: (0, 0)),    # weight fully resident
            pl.BlockSpec((1, H), lambda i: (0, 0)),    # bias
        ]
        out_specs = pl.BlockSpec((tm, H), lambda i: (i, 0))
        dims = ("parallel",)
        bytes_accessed = (Mp * H * (msg_b + skip_b + out_b) + H * H * w_b + H * 4)
        flops = 2 * Mp * H * H
    else:
        grid = (n_row, n_col)                          # rows outer, cols inner
        in_specs = [
            pl.BlockSpec((tm, Hp), lambda i, j: (i, 0)),  # resident across cols
            pl.BlockSpec((tm, tn), lambda i, j: (i, j)),
            pl.BlockSpec((Hp, tn), lambda i, j: (0, j)),  # re-read per row block
            pl.BlockSpec((1, tn), lambda i, j: (0, j)),
        ]
        out_specs = pl.BlockSpec((tm, tn), lambda i, j: (i, j))
        dims = ("parallel", "arbitrary")               # shard rows across TCs
        bytes_accessed = (Mp * Hp * (msg_b + skip_b + out_b)
                          + n_row * Hp * Hp * w_b + Hp * 4)
        flops = 2 * Mp * Hp * Hp

    cost = pl.CostEstimate(flops=flops, transcendentals=0,
                           bytes_accessed=bytes_accessed)

    out2d = pl.pallas_call(
        functools.partial(_message_kernel, activation=activation),
        out_shape=jax.ShapeDtypeStruct((Mp, Hp), out_dtype),
        grid_spec=pltpu.PrefetchScalarGridSpec(
            num_scalar_prefetch=0,
            grid=grid,
            in_specs=in_specs,
            out_specs=out_specs,
        ),
        compiler_params=pltpu.CompilerParams(
            dimension_semantics=dims,
            vmem_limit_bytes=vmem_limit,
        ),
        cost_estimate=cost,
    )(msg2d, skip2d, weight_t, bias2d)

    if Mp != M or Hp != H:
        out2d = out2d[:M, :H]
    return out2d.reshape(B, N, H)


def init_message_params(key, n_hidden, T=1, dtype=jnp.float32):
    """Synthetic init matching nn.Linear(n_hidden, n_hidden) x T.

    Returns [(weight_transposed (H, H) in `dtype`, bias (H,) f32)] per step.
    Pre-casting the weight to bf16 here (outside jit) avoids a per-call
    conversion pass over the weight.
    """
    params = []
    bound = 1.0 / jnp.sqrt(jnp.float32(n_hidden))
    for _ in range(T):
        kw, kb, key = jax.random.split(key, 3)
        w = jax.random.uniform(kw, (n_hidden, n_hidden), jnp.float32,
                               minval=-bound, maxval=bound)  # (out, in)
        b = jax.random.uniform(kb, (n_hidden,), jnp.float32,
                               minval=-bound, maxval=bound)
        params.append((w.T.astype(dtype), b))  # stored transposed for x @ W.T
    return params


def message_ref(message, skip, weight_t, bias):
    """Pure-JAX reference of the PyTorch forward (activation=None -> ReLU)."""
    a = jnp.einsum("bnh,ho->bno", message.astype(jnp.float32),
                   weight_t.astype(jnp.float32)) + bias + skip
    return jnp.maximum(a, 0.0)


if __name__ == "__main__":
    key = jax.random.PRNGKey(0)

    # --- default module shapes: batch=2, nodes=8, hidden=32 (f32) ------------
    B, N, H, T = 2, 8, 32, 1
    k1, k2, k3, k4 = jax.random.split(key, 4)
    message = jax.random.normal(k1, (B, N, H), jnp.float32)
    skip = jax.random.normal(k2, (B, N, H), jnp.float32)
    w_t, b = init_message_params(k3, H, T)[0]   # forward(..., iter=0)

    out = jax.block_until_ready(message_forward(message, skip, w_t, b))
    ref = message_ref(message, skip, w_t, b)
    assert out.shape == (B, N, H)
    assert jnp.allclose(out, ref, atol=1e-5, rtol=1e-5)

    # --- ragged shape exercising the (tiny, bounded) row-padding path --------
    B2, N2, H2 = 3, 7, 48
    j1, j2, j3 = jax.random.split(k4, 3)
    m2 = jax.random.normal(j1, (B2, N2, H2), jnp.float32)
    s2 = jax.random.normal(j2, (B2, N2, H2), jnp.float32)
    w2, b2 = init_message_params(j3, H2, 1)[0]
    out2 = jax.block_until_ready(message_forward(m2, s2, w2, b2))
    ref2 = message_ref(m2, s2, w2, b2)
    assert out2.shape == (B2, N2, H2)
    assert jnp.allclose(out2, ref2, atol=1e-5, rtol=1e-5)

    # --- bf16 streaming fast path: message/weight pre-cast outside the call,
    #     skip kept f32, f32 accumulate, bf16 output.
    msg_bf = message.astype(jnp.bfloat16)
    w_bf, b_bf = init_message_params(k3, H, T, dtype=jnp.bfloat16)[0]
    out_bf = jax.block_until_ready(message_forward(msg_bf, skip, w_bf, b_bf))
    assert out_bf.shape == (B, N, H) and out_bf.dtype == jnp.bfloat16
    assert jnp.allclose(out_bf.astype(jnp.float32), ref, atol=5e-2, rtol=5e-2)

    print("KERNEL_OK")
</pallas_src>

<mosaic_0001>
module attributes {stable_mosaic.version = 11 : i64} {
  func.func @_message_kernel(%arg0: i32, %arg1: memref<16x32xf32, #tpu.memory_space<vmem>>, %arg2: memref<16x32xf32, #tpu.memory_space<vmem>>, %arg3: memref<32x32xf32, #tpu.memory_space<vmem>>, %arg4: memref<1x32xf32, #tpu.memory_space<vmem>>, %arg5: memref<16x32xf32, #tpu.memory_space<vmem>>) attributes {dimension_semantics = [#tpu.dimension_semantics<parallel>], iteration_bounds = array<i64: 1>, scalar_prefetch = 0 : i64, scratch_operands = 0 : i64, tpu.core_type = #tpu.core_type<tc>, window_params = [{transform_indices = @transform_0, window_bounds = array<i64: 16, 32>}, {transform_indices = @transform_1, window_bounds = array<i64: 16, 32>}, {pipeline_mode = #tpu.pipeline_mode<synchronous>, transform_indices = @transform_2, window_bounds = array<i64: 32, 32>}, {pipeline_mode = #tpu.pipeline_mode<synchronous>, transform_indices = @transform_3, window_bounds = array<i64: 1, 32>}, {transform_indices = @transform_4, window_bounds = array<i64: 16, 32>}]} {
    %c0 = arith.constant 0 : index
    %c0_0 = arith.constant 0 : index
    %0 = vector.load %arg1[%c0, %c0_0] : memref<16x32xf32, #tpu.memory_space<vmem>>, vector<16x32xf32>
    %c0_1 = arith.constant 0 : index
    %c0_2 = arith.constant 0 : index
    %1 = vector.load %arg3[%c0_1, %c0_2] : memref<32x32xf32, #tpu.memory_space<vmem>>, vector<32x32xf32>
    %cst = arith.constant dense<0.000000e+00> : vector<16x32xf32>
    %2 = tpu.matmul %0, %1, %cst {dimension_numbers = #tpu.dot_dimension_numbers<[1], [0], [0], [1], [0, 0, 1, 1], [], []>} : vector<16x32xf32>, vector<32x32xf32>, vector<16x32xf32> -> vector<16x32xf32>
    %c0_3 = arith.constant 0 : index
    %c0_4 = arith.constant 0 : index
    %3 = vector.load %arg4[%c0_3, %c0_4] : memref<1x32xf32, #tpu.memory_space<vmem>>, vector<1x32xf32>
    %4 = vector.broadcast %3 : vector<1x32xf32> to vector<16x32xf32>
    %5 = arith.addf %2, %4 : vector<16x32xf32>
    %c0_5 = arith.constant 0 : index
    %c0_6 = arith.constant 0 : index
    %6 = vector.load %arg2[%c0_5, %c0_6] : memref<16x32xf32, #tpu.memory_space<vmem>>, vector<16x32xf32>
    %7 = arith.addf %5, %6 : vector<16x32xf32>
    %cst_7 = arith.constant 0.000000e+00 : f32
    %8 = vector.broadcast %cst_7 : f32 to vector<16x32xf32>
    %9 = arith.maximumf %7, %8 : vector<16x32xf32>
    %c0_8 = arith.constant 0 : index
    %c0_9 = arith.constant 0 : index
    %10 = vector.load %arg5[%c0_8, %c0_9] : memref<16x32xf32, #tpu.memory_space<vmem>>, vector<16x32xf32>
    tpu.vector_store %arg5[%c0_8, %c0_9], %9 {strides = array<i32>} : memref<16x32xf32, #tpu.memory_space<vmem>>, vector<16x32xf32>,
    return
  }
  func.func @transform_0(%arg0: i32) -> (i32, i32) {
    %c0_i32 = arith.constant 0 : i32
    %c0_i32_0 = arith.constant 0 : i32
    return %arg0, %c0_i32 : i32, i32
  }
  func.func @transform_1(%arg0: i32) -> (i32, i32) {
    %c0_i32 = arith.constant 0 : i32
    %c0_i32_0 = arith.constant 0 : i32
    return %arg0, %c0_i32 : i32, i32
  }
  func.func @transform_2(%arg0: i32) -> (i32, i32) {
    %c0_i32 = arith.constant 0 : i32
    %c0_i32_0 = arith.constant 0 : i32
    %c0_i32_1 = arith.constant 0 : i32
    return %c0_i32, %c0_i32_0 : i32, i32
  }
  func.func @transform_3(%arg0: i32) -> (i32, i32) {
    %c0_i32 = arith.constant 0 : i32
    %c0_i32_0 = arith.constant 0 : i32
    %c0_i32_1 = arith.constant 0 : i32
    return %c0_i32, %c0_i32_0 : i32, i32
  }
  func.func @transform_4(%arg0: i32) -> (i32, i32) {
    %c0_i32 = arith.constant 0 : i32
    %c0_i32_0 = arith.constant 0 : i32
    return %arg0, %c0_i32 : i32, i32
  }
}

</mosaic_0001>

<llo_original>
// kernel: message_forward.1
$region0: #{message_forward.1}
  #allocation0 [shape = 'u32[]', space=smem, size = 0x4, offset = 0x4, fixed_abs, tag = 'smem constant byte address 0x4 - core index']
  #allocation1 [shape = 'u32[72,128]{1,0:T(1,128)}', space=vmem, size = 0x9000, scoped, tag = 'internal scratch']
  %s0 = inlined_call_operand.hbm [shape: f32[16,32], index: 0, kind: input, shape index: {}]
  %s1 = inlined_call_operand.hbm [shape: f32[16,32], index: 1, kind: input, shape index: {}]
  %s2 = inlined_call_operand.hbm [shape: f32[32,32], index: 2, kind: input, shape index: {}]
  %s3 = inlined_call_operand.vmem [shape: f32[1,32], index: 3, kind: input, shape index: {}]
  %s4 = inlined_call_operand.hbm [shape: f32[16,32], index: 4, kind: output, shape index: {}]
  %s5 = sld [smem:[#allocation0]]
  $region38: #{message_forward.1} parent=0
    _
  %s7 = ssub.s32 1, %s5
  %s8 = scalar_select 0, %s7, %s5
  $region1: #{message_forward.1} parent=0
    #allocation2 [shape = 'u8[8192]{0}', space=vmem, size = 0x2000, scoped, tag = 'input window, operand 0, single buffered']
    #allocation3 [shape = 's32[1]{0}', space=sflag, size = 0x4, scoped, tag = 'scoped memory for message_forward.1']
    #allocation4 [shape = 's32[1]{0}', space=sflag, size = 0x4, scoped, tag = 'scoped memory for message_forward.1']
    #allocation5 [shape = 'u8[8192]{0}', space=vmem, size = 0x2000, scoped, tag = 'input window, operand 1, single buffered']
    #allocation6 [shape = 's32[1]{0}', space=sflag, size = 0x4, scoped, tag = 'scoped memory for message_forward.1']
    #allocation7 [shape = 'u8[16384]{0}', space=vmem, size = 0x4000, scoped, tag = 'input window, operand 2, single buffered']
    #allocation8 [shape = 'u8[8192]{0}', space=vmem, size = 0x2000, scoped, tag = 'output window, operand 0, single buffered']
    %9 = vsyncpa [#allocation3], 0
    %10 = vsyncpa [#allocation6], 0
    %11 = vsyncpa [#allocation4], 0
    // Predicated region
    $region2: #{message_forward.1} parent=1 // pred_check
      _
    $region3: #{message_forward.1} parent=1 // pred_check_branch
      %13 = sbr.rel (0) target = $region5
    $region4: #{message_forward.1} parent=1 // pred_region
      %15 = vsyncadd [#allocation3], 0
      %s16 = sshll.u32 %s0, 4
      %s17 = int_to_ptr.hbm [resolvable:$true] %s16
      %s18 = sshll.u32 [#allocation2], 4
      %s19 = int_to_ptr.vmem [resolvable:$true] %s18
      %24 = dma.hbm_to_vmem [thread:$0]  %s17, 256, %s19, [#allocation3], 128, 128, 8
    $region5: #{message_forward.1} parent=1 // pred_fallthru
      _
    // Predicated region
    $region6: #{message_forward.1} parent=1 // pred_check
      _
    $region7: #{message_forward.1} parent=1 // pred_check_branch
      %26 = sbr.rel (0) target = $region9
    $region8: #{message_forward.1} parent=1 // pred_region
      %28 = vsyncadd [#allocation6], 0
      %s29 = sshll.u32 %s1, 4
      %s30 = int_to_ptr.hbm [resolvable:$true] %s29
      %s31 = sshll.u32 [#allocation5], 4
      %s32 = int_to_ptr.vmem [resolvable:$true] %s31
      %37 = dma.hbm_to_vmem [thread:$0]  %s30, 256, %s32, [#allocation6], 128, 128, 8
    $region9: #{message_forward.1} parent=1 // pred_fallthru
      _
    // Predicated region
    $region10: #{message_forward.1} parent=1 // pred_check
      _
    $region11: #{message_forward.1} parent=1 // pred_check_branch
      %39 = sbr.rel (0) target = $region13
    $region12: #{message_forward.1} parent=1 // pred_region
      %41 = vsyncadd [#allocation6], 0
      %s42 = sshll.u32 %s2, 4
      %s43 = int_to_ptr.hbm [resolvable:$true] %s42
      %s44 = sshll.u32 [#allocation7], 4
      %s45 = int_to_ptr.vmem [resolvable:$true] %s44
      %50 = dma.hbm_to_vmem [thread:$0]  %s43, 512, %s45, [#allocation6], 128, 128, 8
    $region13: #{message_forward.1} parent=1 // pred_fallthru
      _
    // Predicated region
    $region14: #{message_forward.1} parent=1 // pred_check
      _
    $region15: #{message_forward.1} parent=1 // pred_check_branch
      %52 = sbr.rel (0) target = $region17
    $region16: #{message_forward.1} parent=1 // pred_region
      _
    $region17: #{message_forward.1} parent=1 // pred_fallthru
      _
    // Predicated region
    $region18: #{message_forward.1} parent=1 // pred_check
      _
    $region19: #{message_forward.1} parent=1 // pred_check_branch
      %54 = sbr.rel (0) target = $region21
    $region20: #{message_forward.1} parent=1 // pred_region
      %56 = dma.done [#allocation3], 256
    $region21: #{message_forward.1} parent=1 // pred_fallthru
      _
    // Predicated region
    $region22: #{message_forward.1} parent=1 // pred_check
      _
    $region23: #{message_forward.1} parent=1 // pred_check_branch
      %58 = sbr.rel (0) target = $region25
    $region24: #{message_forward.1} parent=1 // pred_region
      %60 = dma.done [#allocation6], 256
    $region25: #{message_forward.1} parent=1 // pred_fallthru
      _
    // Predicated region
    $region26: #{message_forward.1} parent=1 // pred_check
      _
    $region27: #{message_forward.1} parent=1 // pred_check_branch
      %62 = sbr.rel (0) target = $region29
    $region28: #{message_forward.1} parent=1 // pred_region
      %64 = dma.done [#allocation6], 512
    $region29: #{message_forward.1} parent=1 // pred_fallthru
      _
    %v65 = vld [vmem:[#allocation2] sm:$0xff]
    %v66 = vld [vmem:[#allocation2 + $0x8] sm:$0xff]
    %v67 = vld [vmem:[#allocation7] sm:$0xff]
    %v68 = vld [vmem:[#allocation7 + $0x8] sm:$0xff]
    %v69 = vld [vmem:[#allocation7 + $0x10] sm:$0xff]
    %v70 = vld [vmem:[#allocation7 + $0x18] sm:$0xff]
    %v71 = vld [vmem:[%s3] sm:$0x1]
    %v73 = vperm.slane %v71, 0
    %vm75 = vcmask 261120
    %v77 = vsel %vm75, %v65, 0
    %v80 = vsel %vm75, %v66, 0
    %82 = vmatpush.msra.mxu0 0.0
    %83 = vmatpush.msra.mxu0 0.0
    %84 = vmatpush.msra.mxu0 0.0
    %85 = vmatpush.msra.mxu0 0.0
    %86 = vmatpush.msra.mxu0 0.0
    %87 = vmatpush.msra.mxu0 0.0
    %88 = vmatpush.msra.mxu0 0.0
    %89 = vmatpush.msra.mxu0 0.0
    %90 = vmatpush.msra.mxu0 0.0
    %91 = vmatpush.msra.mxu0 0.0
    %92 = vmatpush.msra.mxu0 0.0
    %93 = vmatpush.msra.mxu0 0.0
    %94 = vmatpush.msra.mxu0 %v70
    %95 = vmatpush.msra.mxu0 %v69
    %96 = vmatpush.msra.mxu0 %v68
    %97 = vmatpush.msra.mxu0 %v67
    %98 = vmatmul.f32.gmra.mxu0 %v77
    %v99 = vpop.f32.mrf.mxu0
    %v100 = vadd.f32 %v73, %v99
    %101 = vmatmul.f32.gmra.mxu0 %v80
    %v102 = vpop.f32.mrf.mxu0
    %v103 = vadd.f32 %v73, %v102
    %104 = vdwg.mxu0
    %v105 = vld [vmem:[#allocation5] sm:$0xff]
    %v106 = vld [vmem:[#allocation5 + $0x8] sm:$0xff]
    %v107 = vadd.f32 %v100, %v105
    %v108 = vadd.f32 %v103, %v106
    %v109 = vmax.f32 %v107, 0.0
    %v110 = vmax.f32 %v108, 0.0
    %111 = vst.msk [vmem:[#allocation8] sm:$0xff] %vm75, %v109
    %112 = vst.msk [vmem:[#allocation8 + $0x8] sm:$0xff] %vm75, %v110
    // Predicated region
    $region30: #{message_forward.1} parent=1 // pred_check
      _
    $region31: #{message_forward.1} parent=1 // pred_check_branch
      %114 = sbr.rel (0) target = $region33
    $region32: #{message_forward.1} parent=1 // pred_region
      %116 = vsyncadd [#allocation4], 0
      %s117 = sshll.u32 [#allocation8], 4
      %s118 = int_to_ptr.vmem [resolvable:$true] %s117
      %s119 = sshll.u32 %s4, 4
      %s120 = int_to_ptr.hbm [resolvable:$true] %s119
      %125 = dma.vmem_to_hbm [thread:$0]  %s118, 256, %s120, [#allocation4], 128, 128, 8
    $region33: #{message_forward.1} parent=1 // pred_fallthru
      _
    // Predicated region
    $region34: #{message_forward.1} parent=1 // pred_check
      _
    $region35: #{message_forward.1} parent=1 // pred_check_branch
      %127 = sbr.rel (0) target = $region37
    $region36: #{message_forward.1} parent=1 // pred_region
      %129 = dma.done [#allocation4], 256
    $region37: #{message_forward.1} parent=1 // pred_fallthru
      _
    %130 = vsyncpa [#allocation3], 1
    %131 = vsyncpa [#allocation6], 1
    %132 = vsyncpa [#allocation4], 1

</llo_original>
